<compile_context>
chip_gen: v7x
topology: tpu7x:2x2x1
jax: 0.10.0
libtpu: 0.0.40
codegen_flags: <defaults>
</compile_context>

<pallas_src>
import jax
import jax.numpy as jnp
from jax.experimental import pallas as pl
from jax.experimental.pallas import tpu as pltpu

INPUT_SIZE = 32
HIDDEN_SIZE = 32
FINAL_SIZE = 32
LN_EPS = 1e-5

PACK = 4                      # samples packed per 128-lane row
LANES = PACK * HIDDEN_SIZE    # 128
ROW_GRAN = 16                 # row-tile granularity (bf16-safe sublane tiling)


def _round_up(n, m):
    return ((n + m - 1) // m) * m


# ---------------------------------------------------------------------------
# Kernel
# ---------------------------------------------------------------------------
def mlp_kernel(x_ref, w1aug_ref, mavg_ref, g_ref, b_ref, w2_ref, w3_ref, o_ref):
    mm_dtype = w2_ref.dtype          # bf16 (perf) or f32 (exact parity)

    x = x_ref[...]                   # (tile_rows, 128): 4 packed samples/row

    # ---- Linear(in->h, no bias) fused with LN mean: one 128x256 MXU pass
    #      gives [h | mean]  (W1_aug = [W1_bd | W1_bd @ Mavg]).
    h_aug = jnp.dot(x, w1aug_ref[...], preferred_element_type=jnp.float32)
    h = h_aug[:, :LANES]             # lane-aligned slices (free)
    mean = h_aug[:, LANES:]

    # ---- LayerNorm over each 32-lane segment; single-pass stats on the MXU.
    ex2 = jnp.dot((h * h).astype(mm_dtype), mavg_ref[...],
                  preferred_element_type=jnp.float32)            # E[h^2]
    var = jnp.maximum(ex2 - mean * mean, 0.0)                    # clamp rounding
    h = (h - mean) * jax.lax.rsqrt(var + LN_EPS)
    h = h * g_ref[...] + b_ref[...]                              # f32 elementwise

    # ---- ReLU (+ Dropout identity, eval mode)
    h = jnp.maximum(h, 0.0)

    # ---- Linear(h->h, no bias) + ReLU (+ Dropout identity)
    h = jnp.maximum(
        jnp.dot(h.astype(mm_dtype), w2_ref[...],
                preferred_element_type=jnp.float32), 0.0)

    # ---- ResidualBlock: h + relu(h @ W3^T)   (Dropout identity)
    r = jnp.maximum(
        jnp.dot(h.astype(mm_dtype), w3_ref[...],
                preferred_element_type=jnp.float32), 0.0)

    o_ref[...] = (h + r).astype(o_ref.dtype)


# ---------------------------------------------------------------------------
# One-time parameter prep (hoisted out of the forward path)
# ---------------------------------------------------------------------------
def prepare_weights(w1, gamma, beta, w2, w3, *, use_bf16=True):
    """Pre-transpose to (in, out), expand to 128x128 block-diagonal matrices so
    the 4-sample packed matmul is exact, fold the LN mean into W1
    (W1_aug = [W1_bd | W1_bd @ Mavg], 128x256), tile gamma/beta to the packed
    layout, and optionally cast the matmul operands to bf16."""
    mm_dtype = jnp.bfloat16 if use_bf16 else jnp.float32
    eye = jnp.eye(PACK, dtype=jnp.float32)
    w1_bd = jnp.kron(eye, w1.T.astype(jnp.float32))                     # (128,128)
    w2_bd = jnp.kron(eye, w2.T.astype(jnp.float32))
    w3_bd = jnp.kron(eye, w3.T.astype(jnp.float32))
    mavg = jnp.kron(eye, jnp.full((HIDDEN_SIZE, HIDDEN_SIZE),
                                  1.0 / HIDDEN_SIZE, jnp.float32))      # seg mean
    w1_aug = jnp.concatenate([w1_bd, w1_bd @ mavg], axis=1)             # (128,256)
    gamma_t = jnp.tile(gamma.astype(jnp.float32), PACK).reshape(1, LANES)
    beta_t = jnp.tile(beta.astype(jnp.float32), PACK).reshape(1, LANES)
    return (w1_aug.astype(mm_dtype), mavg.astype(mm_dtype), gamma_t, beta_t,
            w2_bd.astype(mm_dtype), w3_bd.astype(mm_dtype))


# ---------------------------------------------------------------------------
# Tiling heuristics (generation-aware)
# ---------------------------------------------------------------------------
_GEN_CONFIG = {
    # max_tile keeps in+out double-buffered f32 tiles + resident weights
    # comfortably under each generation's scoped-VMEM default.
    "v5e": dict(max_tile=4096, two_core=False),   # 16 MiB scoped default
    "v6e": dict(max_tile=8192, two_core=False),   # 32 MiB scoped default
    "v7x": dict(max_tile=8192, two_core=True),    # 32 MiB scoped / 64 MiB phys
    "unknown": dict(max_tile=2048, two_core=False),
}


def _tpu_generation():
    try:
        kind = jax.devices()[0].device_kind.lower()
    except Exception:
        return "unknown"
    if "v5" in kind and ("lite" in kind or "5e" in kind):
        return "v5e"
    if "v6" in kind:
        return "v6e"
    if "v7" in kind:
        return "v7x"
    return "unknown"


def _choose_tile_rows(rows, *, max_tile, two_core):
    """Largest row tile (multiple of ROW_GRAN) under the generation cap.
    2-TC chips (v7x): aim for an even count of >=2 balanced grid steps so both
    TensorCores get work.  1-TC chips (v5e/v6e): the grid is a serial loop, so
    one maximal block minimizes the ~0.35us/step overhead."""
    if two_core and rows > ROW_GRAN:
        n_steps = max(2, pl.cdiv(rows, max_tile))
        if n_steps % 2:
            n_steps += 1
        tile = _round_up(pl.cdiv(rows, n_steps), ROW_GRAN)
    else:
        tile = min(max_tile, _round_up(rows, ROW_GRAN))
    return max(ROW_GRAN, tile)


# ---------------------------------------------------------------------------
# Forward wrapper
# ---------------------------------------------------------------------------
def mlp_forward(x, w1_aug, mavg, gamma_t, beta_t, w2_bd, w3_bd, *, tile_rows=None):
    B, f_in = x.shape
    assert f_in == INPUT_SIZE
    out_dtype = x.dtype
    mm_dtype = w2_bd.dtype

    # Lane-dense packing: 4 consecutive samples per 128-lane row (free reshape).
    pad_b = (-B) % PACK
    if pad_b:
        x = jnp.concatenate([x, jnp.zeros((pad_b, f_in), x.dtype)], axis=0)
    rows = x.shape[0] // PACK
    x_packed = x.reshape(rows, LANES).astype(mm_dtype)   # bf16 halves input DMA

    if tile_rows is None:
        cfg = _GEN_CONFIG[_tpu_generation()]
        tile_rows = _choose_tile_rows(rows, **cfg)
    tile_rows = max(ROW_GRAN, _round_up(tile_rows, ROW_GRAN))

    # Pad rows to a tile multiple — never fall back to an unbounded block or a
    # degenerate tiny tile (output is sliced back to B below).
    rows_padded = _round_up(rows, tile_rows)
    if rows_padded != rows:
        x_packed = jnp.concatenate(
            [x_packed, jnp.zeros((rows_padded - rows, LANES), mm_dtype)], axis=0)
    grid = (rows_padded // tile_rows,)

    out_packed = pl.pallas_call(
        mlp_kernel,
        out_shape=jax.ShapeDtypeStruct((rows_padded, LANES), out_dtype),
        grid_spec=pltpu.PrefetchScalarGridSpec(
            num_scalar_prefetch=0,
            grid=grid,
            in_specs=[
                pl.BlockSpec((tile_rows, LANES), lambda i: (i, 0)),      # x
                pl.BlockSpec((LANES, 2 * LANES), lambda i: (0, 0)),      # W1_aug
                pl.BlockSpec((LANES, LANES), lambda i: (0, 0)),          # Mavg
                pl.BlockSpec((1, LANES), lambda i: (0, 0)),              # gamma
                pl.BlockSpec((1, LANES), lambda i: (0, 0)),              # beta
                pl.BlockSpec((LANES, LANES), lambda i: (0, 0)),          # W2
                pl.BlockSpec((LANES, LANES), lambda i: (0, 0)),          # W3
            ],
            out_specs=pl.BlockSpec((tile_rows, LANES), lambda i: (i, 0)),
        ),
        compiler_params=pltpu.CompilerParams(
            dimension_semantics=("parallel",)),
    )(x_packed, w1_aug, mavg, gamma_t, beta_t, w2_bd, w3_bd)

    out = out_packed.reshape(rows_padded * PACK, FINAL_SIZE)
    return out[:B]


# ---------------------------------------------------------------------------
# Pure-JAX reference (mirrors the PyTorch forward in eval mode)
# ---------------------------------------------------------------------------
def mlp_reference(x, w1, gamma, beta, w2, w3):
    h = x @ w1.T
    mean = jnp.mean(h, axis=-1, keepdims=True)
    var = jnp.mean(jnp.square(h - mean), axis=-1, keepdims=True)
    h = (h - mean) / jnp.sqrt(var + LN_EPS) * gamma + beta
    h = jnp.maximum(h, 0.0)
    h = jnp.maximum(h @ w2.T, 0.0)
    return h + jnp.maximum(h @ w3.T, 0.0)


if __name__ == "__main__":
    key = jax.random.PRNGKey(0)
    kx, k1, k2, k3 = jax.random.split(key, 4)

    B = 16
    x = jax.random.normal(kx, (B, INPUT_SIZE), dtype=jnp.float32)

    # Deterministic parameter init (kaiming-uniform-ish, like nn.Linear).
    def init_linear(k, out_f, in_f):
        bound = 1.0 / jnp.sqrt(in_f)
        return jax.random.uniform(k, (out_f, in_f), jnp.float32, -bound, bound)

    w1 = init_linear(k1, HIDDEN_SIZE, INPUT_SIZE)
    w2 = init_linear(k2, HIDDEN_SIZE, HIDDEN_SIZE)
    w3 = init_linear(k3, HIDDEN_SIZE, HIDDEN_SIZE)
    gamma = jnp.ones((HIDDEN_SIZE,), jnp.float32)   # nn.LayerNorm defaults
    beta = jnp.zeros((HIDDEN_SIZE,), jnp.float32)

    ref = mlp_reference(x, w1, gamma, beta, w2, w3)

    # ---- f32 matmul-operand path: exact parity with the f32 reference.
    params_f32 = prepare_weights(w1, gamma, beta, w2, w3, use_bf16=False)
    out_f32 = jax.block_until_ready(mlp_forward(x, *params_f32))
    assert out_f32.shape == (B, FINAL_SIZE)
    assert jnp.allclose(out_f32, ref, atol=1e-4, rtol=1e-4), "f32 mismatch vs ref"

    # ---- bf16 matmul-operand path (default for perf; f32 accumulation).
    params_bf16 = prepare_weights(w1, gamma, beta, w2, w3, use_bf16=True)
    out_bf16 = jax.block_until_ready(mlp_forward(x, *params_bf16))
    assert out_bf16.shape == (B, FINAL_SIZE)
    assert jnp.allclose(out_bf16, ref, atol=5e-2, rtol=5e-2), "bf16 mismatch vs ref"

    # TODO(synk): dropout with dropout_rate > 0 in training mode would need
    # pltpu.prng_seed / pltpu.prng_random_bits; eval-mode dropout is identity.
    print("KERNEL_OK")
</pallas_src>

<mosaic_0001>
module attributes {stable_mosaic.version = 11 : i64} {
  func.func @mlp_kernel(%arg0: i32, %arg1: memref<16x128xf32, #tpu.memory_space<vmem>>, %arg2: memref<128x256xf32, #tpu.memory_space<vmem>>, %arg3: memref<128x128xf32, #tpu.memory_space<vmem>>, %arg4: memref<1x128xf32, #tpu.memory_space<vmem>>, %arg5: memref<1x128xf32, #tpu.memory_space<vmem>>, %arg6: memref<128x128xf32, #tpu.memory_space<vmem>>, %arg7: memref<128x128xf32, #tpu.memory_space<vmem>>, %arg8: memref<16x128xf32, #tpu.memory_space<vmem>>) attributes {dimension_semantics = [#tpu.dimension_semantics<parallel>], iteration_bounds = array<i64: 1>, scalar_prefetch = 0 : i64, scratch_operands = 0 : i64, tpu.core_type = #tpu.core_type<tc>, window_params = [{transform_indices = @transform_0, window_bounds = array<i64: 16, 128>}, {pipeline_mode = #tpu.pipeline_mode<synchronous>, transform_indices = @transform_1, window_bounds = array<i64: 128, 256>}, {pipeline_mode = #tpu.pipeline_mode<synchronous>, transform_indices = @transform_2, window_bounds = array<i64: 128, 128>}, {pipeline_mode = #tpu.pipeline_mode<synchronous>, transform_indices = @transform_3, window_bounds = array<i64: 1, 128>}, {pipeline_mode = #tpu.pipeline_mode<synchronous>, transform_indices = @transform_4, window_bounds = array<i64: 1, 128>}, {pipeline_mode = #tpu.pipeline_mode<synchronous>, transform_indices = @transform_5, window_bounds = array<i64: 128, 128>}, {pipeline_mode = #tpu.pipeline_mode<synchronous>, transform_indices = @transform_6, window_bounds = array<i64: 128, 128>}, {transform_indices = @transform_7, window_bounds = array<i64: 16, 128>}]} {
    %c0 = arith.constant 0 : index
    %c0_0 = arith.constant 0 : index
    %0 = vector.load %arg1[%c0, %c0_0] : memref<16x128xf32, #tpu.memory_space<vmem>>, vector<16x128xf32>
    %c0_1 = arith.constant 0 : index
    %c0_2 = arith.constant 0 : index
    %1 = vector.load %arg2[%c0_1, %c0_2] : memref<128x256xf32, #tpu.memory_space<vmem>>, vector<128x256xf32>
    %cst = arith.constant dense<0.000000e+00> : vector<16x256xf32>
    %2 = tpu.matmul %0, %1, %cst {dimension_numbers = #tpu.dot_dimension_numbers<[1], [0], [0], [1], [0, 0, 1, 1], [], []>} : vector<16x128xf32>, vector<128x256xf32>, vector<16x256xf32> -> vector<16x256xf32>
    %3 = vector.extract_strided_slice %2 {offsets = [0, 0], sizes = [16, 128], strides = [1, 1]} : vector<16x256xf32> to vector<16x128xf32>
    %4 = vector.extract_strided_slice %2 {offsets = [0, 128], sizes = [16, 128], strides = [1, 1]} : vector<16x256xf32> to vector<16x128xf32>
    %5 = arith.mulf %3, %3 : vector<16x128xf32>
    %c0_3 = arith.constant 0 : index
    %c0_4 = arith.constant 0 : index
    %6 = vector.load %arg3[%c0_3, %c0_4] : memref<128x128xf32, #tpu.memory_space<vmem>>, vector<128x128xf32>
    %cst_5 = arith.constant dense<0.000000e+00> : vector<16x128xf32>
    %7 = tpu.matmul %5, %6, %cst_5 {dimension_numbers = #tpu.dot_dimension_numbers<[1], [0], [0], [1], [0, 0, 1, 1], [], []>} : vector<16x128xf32>, vector<128x128xf32>, vector<16x128xf32> -> vector<16x128xf32>
    %8 = arith.mulf %4, %4 : vector<16x128xf32>
    %9 = arith.subf %7, %8 : vector<16x128xf32>
    %cst_6 = arith.constant 0.000000e+00 : f32
    %10 = vector.broadcast %cst_6 : f32 to vector<16x128xf32>
    %11 = arith.maximumf %9, %10 : vector<16x128xf32>
    %12 = arith.subf %3, %4 : vector<16x128xf32>
    %cst_7 = arith.constant 9.99999974E-6 : f32
    %13 = vector.broadcast %cst_7 : f32 to vector<16x128xf32>
    %14 = arith.addf %11, %13 : vector<16x128xf32>
    %15 = math.rsqrt %14 : vector<16x128xf32>
    %16 = arith.mulf %12, %15 : vector<16x128xf32>
    %c0_8 = arith.constant 0 : index
    %c0_9 = arith.constant 0 : index
    %17 = vector.load %arg4[%c0_8, %c0_9] : memref<1x128xf32, #tpu.memory_space<vmem>>, vector<1x128xf32>
    %18 = vector.broadcast %17 : vector<1x128xf32> to vector<16x128xf32>
    %19 = arith.mulf %16, %18 : vector<16x128xf32>
    %c0_10 = arith.constant 0 : index
    %c0_11 = arith.constant 0 : index
    %20 = vector.load %arg5[%c0_10, %c0_11] : memref<1x128xf32, #tpu.memory_space<vmem>>, vector<1x128xf32>
    %21 = vector.broadcast %20 : vector<1x128xf32> to vector<16x128xf32>
    %22 = arith.addf %19, %21 : vector<16x128xf32>
    %cst_12 = arith.constant 0.000000e+00 : f32
    %23 = vector.broadcast %cst_12 : f32 to vector<16x128xf32>
    %24 = arith.maximumf %22, %23 : vector<16x128xf32>
    %c0_13 = arith.constant 0 : index
    %c0_14 = arith.constant 0 : index
    %25 = vector.load %arg6[%c0_13, %c0_14] : memref<128x128xf32, #tpu.memory_space<vmem>>, vector<128x128xf32>
    %cst_15 = arith.constant dense<0.000000e+00> : vector<16x128xf32>
    %26 = tpu.matmul %24, %25, %cst_15 {dimension_numbers = #tpu.dot_dimension_numbers<[1], [0], [0], [1], [0, 0, 1, 1], [], []>} : vector<16x128xf32>, vector<128x128xf32>, vector<16x128xf32> -> vector<16x128xf32>
    %cst_16 = arith.constant 0.000000e+00 : f32
    %27 = vector.broadcast %cst_16 : f32 to vector<16x128xf32>
    %28 = arith.maximumf %26, %27 : vector<16x128xf32>
    %c0_17 = arith.constant 0 : index
    %c0_18 = arith.constant 0 : index
    %29 = vector.load %arg7[%c0_17, %c0_18] : memref<128x128xf32, #tpu.memory_space<vmem>>, vector<128x128xf32>
    %cst_19 = arith.constant dense<0.000000e+00> : vector<16x128xf32>
    %30 = tpu.matmul %28, %29, %cst_19 {dimension_numbers = #tpu.dot_dimension_numbers<[1], [0], [0], [1], [0, 0, 1, 1], [], []>} : vector<16x128xf32>, vector<128x128xf32>, vector<16x128xf32> -> vector<16x128xf32>
    %cst_20 = arith.constant 0.000000e+00 : f32
    %31 = vector.broadcast %cst_20 : f32 to vector<16x128xf32>
    %32 = arith.maximumf %30, %31 : vector<16x128xf32>
    %33 = arith.addf %28, %32 : vector<16x128xf32>
    %c0_21 = arith.constant 0 : index
    %c0_22 = arith.constant 0 : index
    %34 = vector.load %arg8[%c0_21, %c0_22] : memref<16x128xf32, #tpu.memory_space<vmem>>, vector<16x128xf32>
    tpu.vector_store %arg8[%c0_21, %c0_22], %33 {strides = array<i32>} : memref<16x128xf32, #tpu.memory_space<vmem>>, vector<16x128xf32>,
    return
  }
  func.func @transform_0(%arg0: i32) -> (i32, i32) {
    %c0_i32 = arith.constant 0 : i32
    %c0_i32_0 = arith.constant 0 : i32
    return %arg0, %c0_i32 : i32, i32
  }
  func.func @transform_1(%arg0: i32) -> (i32, i32) {
    %c0_i32 = arith.constant 0 : i32
    %c0_i32_0 = arith.constant 0 : i32
    %c0_i32_1 = arith.constant 0 : i32
    return %c0_i32, %c0_i32_0 : i32, i32
  }
  func.func @transform_2(%arg0: i32) -> (i32, i32) {
    %c0_i32 = arith.constant 0 : i32
    %c0_i32_0 = arith.constant 0 : i32
    %c0_i32_1 = arith.constant 0 : i32
    return %c0_i32, %c0_i32_0 : i32, i32
  }
  func.func @transform_3(%arg0: i32) -> (i32, i32) {
    %c0_i32 = arith.constant 0 : i32
    %c0_i32_0 = arith.constant 0 : i32
    %c0_i32_1 = arith.constant 0 : i32
    return %c0_i32, %c0_i32_0 : i32, i32
  }
  func.func @transform_4(%arg0: i32) -> (i32, i32) {
    %c0_i32 = arith.constant 0 : i32
    %c0_i32_0 = arith.constant 0 : i32
    %c0_i32_1 = arith.constant 0 : i32
    return %c0_i32, %c0_i32_0 : i32, i32
  }
  func.func @transform_5(%arg0: i32) -> (i32, i32) {
    %c0_i32 = arith.constant 0 : i32
    %c0_i32_0 = arith.constant 0 : i32
    %c0_i32_1 = arith.constant 0 : i32
    return %c0_i32, %c0_i32_0 : i32, i32
  }
  func.func @transform_6(%arg0: i32) -> (i32, i32) {
    %c0_i32 = arith.constant 0 : i32
    %c0_i32_0 = arith.constant 0 : i32
    %c0_i32_1 = arith.constant 0 : i32
    return %c0_i32, %c0_i32_0 : i32, i32
  }
  func.func @transform_7(%arg0: i32) -> (i32, i32) {
    %c0_i32 = arith.constant 0 : i32
    %c0_i32_0 = arith.constant 0 : i32
    return %arg0, %c0_i32 : i32, i32
  }
}

</mosaic_0001>

<llo_original>
// kernel: tpu_custom_call.1
$region0: #{tpu_custom_call.1}
  #allocation0 [shape = 'u32[]', space=smem, size = 0x4, offset = 0x4, fixed_abs, tag = 'smem constant byte address 0x4 - core index']
  #allocation1 [shape = 'u32[144,128]{1,0:T(1,128)}', space=vmem, size = 0x12000, scoped, tag = 'internal scratch']
  %s0 = inlined_call_operand.hbm [shape: f32[16,128], index: 0, kind: input, shape index: {}]
  %s1 = inlined_call_operand.hbm [shape: f32[128,256], index: 1, kind: input, shape index: {}]
  %s2 = inlined_call_operand.hbm [shape: f32[128,128], index: 2, kind: input, shape index: {}]
  %s3 = inlined_call_operand.vmem [shape: f32[1,128], index: 3, kind: input, shape index: {}]
  %s4 = inlined_call_operand.vmem [shape: f32[1,128], index: 4, kind: input, shape index: {}]
  %s5 = inlined_call_operand.hbm [shape: f32[128,128], index: 5, kind: input, shape index: {}]
  %s6 = inlined_call_operand.hbm [shape: f32[128,128], index: 6, kind: input, shape index: {}]
  %s7 = inlined_call_operand.hbm [shape: f32[16,128], index: 7, kind: output, shape index: {}]
  %s8 = sld [smem:[#allocation0]]
  $region58: #{tpu_custom_call.1} parent=0
    _
  %s10 = ssub.s32 1, %s8
  %s11 = scalar_select 0, %s10, %s8
  $region1: #{tpu_custom_call.1} parent=0
    #allocation2 [shape = 'u8[8192]{0}', space=vmem, size = 0x2000, scoped, tag = 'input window, operand 0, single buffered']
    #allocation3 [shape = 's32[1]{0}', space=sflag, size = 0x4, scoped, tag = 'scoped memory for tpu_custom_call.1']
    #allocation4 [shape = 's32[1]{0}', space=sflag, size = 0x4, scoped, tag = 'scoped memory for tpu_custom_call.1']
    #allocation5 [shape = 'u8[131072]{0}', space=vmem, size = 0x20000, scoped, tag = 'input window, operand 1, single buffered']
    #allocation6 [shape = 's32[1]{0}', space=sflag, size = 0x4, scoped, tag = 'scoped memory for tpu_custom_call.1']
    #allocation7 [shape = 'u8[65536]{0}', space=vmem, size = 0x10000, scoped, tag = 'input window, operand 2, single buffered']
    #allocation8 [shape = 'u8[65536]{0}', space=vmem, size = 0x10000, scoped, tag = 'input window, operand 5, single buffered']
    #allocation9 [shape = 's32[1]{0}', space=sflag, size = 0x4, scoped, tag = 'scoped memory for tpu_custom_call.1']
    #allocation10 [shape = 'u8[65536]{0}', space=vmem, size = 0x10000, scoped, tag = 'input window, operand 6, single buffered']
    #allocation11 [shape = 'u8[8192]{0}', space=vmem, size = 0x2000, scoped, tag = 'output window, operand 0, single buffered']
    %12 = vsyncpa [#allocation3], 0
    %13 = vsyncpa [#allocation6], 0
    %14 = vsyncpa [#allocation9], 0
    %15 = vsyncpa [#allocation4], 0
    // Predicated region
    $region2: #{tpu_custom_call.1} parent=1 // pred_check
      _
    $region3: #{tpu_custom_call.1} parent=1 // pred_check_branch
      %17 = sbr.rel (0) target = $region5
    $region4: #{tpu_custom_call.1} parent=1 // pred_region
      %s19 = ssub.s32 256, 256
      %20 = vsyncadd [#allocation3], %s19
      %s21 = sshll.u32 [#allocation2], 4
      %s22 = int_to_ptr.vmem [resolvable:$true] %s21
      %27 = dma.hbm_to_vmem [thread:$0]  %s0, 256, %s22, [#allocation3], 128, 128, 8
    $region5: #{tpu_custom_call.1} parent=1 // pred_fallthru
      _
    // Predicated region
    $region6: #{tpu_custom_call.1} parent=1 // pred_check
      _
    $region7: #{tpu_custom_call.1} parent=1 // pred_check_branch
      %29 = sbr.rel (0) target = $region9
    $region8: #{tpu_custom_call.1} parent=1 // pred_region
      %s31 = ssub.s32 4096, 4096
      %32 = vsyncadd [#allocation6], %s31
      %s33 = sshll.u32 [#allocation5], 4
      %s34 = int_to_ptr.vmem [resolvable:$true] %s33
      %39 = dma.hbm_to_vmem [thread:$0]  %s1, 4096, %s34, [#allocation6], 256, 256, 16
    $region9: #{tpu_custom_call.1} parent=1 // pred_fallthru
      _
    // Predicated region
    $region10: #{tpu_custom_call.1} parent=1 // pred_check
      _
    $region11: #{tpu_custom_call.1} parent=1 // pred_check_branch
      %41 = sbr.rel (0) target = $region13
    $region12: #{tpu_custom_call.1} parent=1 // pred_region
      %s43 = ssub.s32 2048, 2048
      %44 = vsyncadd [#allocation6], %s43
      %s45 = sshll.u32 [#allocation7], 4
      %s46 = int_to_ptr.vmem [resolvable:$true] %s45
      %51 = dma.hbm_to_vmem [thread:$0]  %s2, 2048, %s46, [#allocation6], 128, 128, 8
    $region13: #{tpu_custom_call.1} parent=1 // pred_fallthru
      _
    // Predicated region
    $region14: #{tpu_custom_call.1} parent=1 // pred_check
      _
    $region15: #{tpu_custom_call.1} parent=1 // pred_check_branch
      %53 = sbr.rel (0) target = $region17
    $region16: #{tpu_custom_call.1} parent=1 // pred_region
      _
    $region17: #{tpu_custom_call.1} parent=1 // pred_fallthru
      _
    // Predicated region
    $region18: #{tpu_custom_call.1} parent=1 // pred_check
      _
    $region19: #{tpu_custom_call.1} parent=1 // pred_check_branch
      %55 = sbr.rel (0) target = $region21
    $region20: #{tpu_custom_call.1} parent=1 // pred_region
      _
    $region21: #{tpu_custom_call.1} parent=1 // pred_fallthru
      _
    // Predicated region
    $region22: #{tpu_custom_call.1} parent=1 // pred_check
      _
    $region23: #{tpu_custom_call.1} parent=1 // pred_check_branch
      %57 = sbr.rel (0) target = $region25
    $region24: #{tpu_custom_call.1} parent=1 // pred_region
      %s59 = ssub.s32 2048, 2048
      %60 = vsyncadd [#allocation9], %s59
      %s61 = sshll.u32 [#allocation8], 4
      %s62 = int_to_ptr.vmem [resolvable:$true] %s61
      %67 = dma.hbm_to_vmem [thread:$0]  %s5, 2048, %s62, [#allocation9], 128, 128, 8
    $region25: #{tpu_custom_call.1} parent=1 // pred_fallthru
      _
    // Predicated region
    $region26: #{tpu_custom_call.1} parent=1 // pred_check
      _
    $region27: #{tpu_custom_call.1} parent=1 // pred_check_branch
      %69 = sbr.rel (0) target = $region29
    $region28: #{tpu_custom_call.1} parent=1 // pred_region
      %s71 = ssub.s32 2048, 2048
      %72 = vsyncadd [#allocation9], %s71
      %s73 = sshll.u32 [#allocation10], 4
      %s74 = int_to_ptr.vmem [resolvable:$true] %s73
      %79 = dma.hbm_to_vmem [thread:$0]  %s6, 2048, %s74, [#allocation9], 128, 128, 8
    $region29: #{tpu_custom_call.1} parent=1 // pred_fallthru
      _
    // Predicated region
    $region30: #{tpu_custom_call.1} parent=1 // pred_check
      _
    $region31: #{tpu_custom_call.1} parent=1 // pred_check_branch
      %81 = sbr.rel (0) target = $region33
    $region32: #{tpu_custom_call.1} parent=1 // pred_region
      %82 = dma.done [#allocation3], 256
    $region33: #{tpu_custom_call.1} parent=1 // pred_fallthru
      _
    // Predicated region
    $region34: #{tpu_custom_call.1} parent=1 // pred_check
      _
    $region35: #{tpu_custom_call.1} parent=1 // pred_check_branch
      %84 = sbr.rel (0) target = $region37
    $region36: #{tpu_custom_call.1} parent=1 // pred_region
      %85 = dma.done [#allocation6], 4096
    $region37: #{tpu_custom_call.1} parent=1 // pred_fallthru
      _
    // Predicated region
    $region38: #{tpu_custom_call.1} parent=1 // pred_check
      _
    $region39: #{tpu_custom_call.1} parent=1 // pred_check_branch
      %87 = sbr.rel (0) target = $region41
    $region40: #{tpu_custom_call.1} parent=1 // pred_region
      %88 = dma.done [#allocation6], 2048
    $region41: #{tpu_custom_call.1} parent=1 // pred_fallthru
      _
    // Predicated region
    $region42: #{tpu_custom_call.1} parent=1 // pred_check
      _
    $region43: #{tpu_custom_call.1} parent=1 // pred_check_branch
      %90 = sbr.rel (0) target = $region45
    $region44: #{tpu_custom_call.1} parent=1 // pred_region
      %91 = dma.done [#allocation9], 2048
    $region45: #{tpu_custom_call.1} parent=1 // pred_fallthru
      _
    // Predicated region
    $region46: #{tpu_custom_call.1} parent=1 // pred_check
      _
    $region47: #{tpu_custom_call.1} parent=1 // pred_check_branch
      %93 = sbr.rel (0) target = $region49
    $region48: #{tpu_custom_call.1} parent=1 // pred_region
      %94 = dma.done [#allocation9], 2048
    $region49: #{tpu_custom_call.1} parent=1 // pred_fallthru
      _
    %v95 = vld [vmem:[#allocation2] sm:$0xff]
    %v96 = vld [vmem:[#allocation2 + $0x8] sm:$0xff]
    %v97 = vld [vmem:[#allocation5] sm:$0xff]
    %v98 = vld [vmem:[#allocation5 + $0x8] sm:$0xff]
    %v99 = vld [vmem:[#allocation5 + $0x10] sm:$0xff]
    %v100 = vld [vmem:[#allocation5 + $0x18] sm:$0xff]
    %v101 = vld [vmem:[#allocation5 + $0x20] sm:$0xff]
    %v102 = vld [vmem:[#allocation5 + $0x28] sm:$0xff]
    %v103 = vld [vmem:[#allocation5 + $0x30] sm:$0xff]
    %v104 = vld [vmem:[#allocation5 + $0x38] sm:$0xff]
    %v105 = vld [vmem:[#allocation5 + $0x40] sm:$0xff]
    %v106 = vld [vmem:[#allocation5 + $0x48] sm:$0xff]
    %v107 = vld [vmem:[#allocation5 + $0x50] sm:$0xff]
    %v108 = vld [vmem:[#allocation5 + $0x58] sm:$0xff]
    %v109 = vld [vmem:[#allocation5 + $0x60] sm:$0xff]
    %v110 = vld [vmem:[#allocation5 + $0x68] sm:$0xff]
    %v111 = vld [vmem:[#allocation5 + $0x70] sm:$0xff]
    %v112 = vld [vmem:[#allocation5 + $0x78] sm:$0xff]
    %v113 = vld [vmem:[#allocation5 + $0x80] sm:$0xff]
    %v114 = vld [vmem:[#allocation5 + $0x88] sm:$0xff]
    %v115 = vld [vmem:[#allocation5 + $0x90] sm:$0xff]
    %v116 = vld [vmem:[#allocation5 + $0x98] sm:$0xff]
    %v117 = vld [vmem:[#allocation5 + $0xa0] sm:$0xff]
    %v118 = vld [vmem:[#allocation5 + $0xa8] sm:$0xff]
    %v119 = vld [vmem:[#allocation5 + $0xb0] sm:$0xff]
    %v120 = vld [vmem:[#allocation5 + $0xb8] sm:$0xff]
    %v121 = vld [vmem:[#allocation5 + $0xc0] sm:$0xff]
    %v122 = vld [vmem:[#allocation5 + $0xc8] sm:$0xff]
    %v123 = vld [vmem:[#allocation5 + $0xd0] sm:$0xff]
    %v124 = vld [vmem:[#allocation5 + $0xd8] sm:$0xff]
    %v125 = vld [vmem:[#allocation5 + $0xe0] sm:$0xff]
    %v126 = vld [vmem:[#allocation5 + $0xe8] sm:$0xff]
    %v127 = vld [vmem:[#allocation5 + $0xf0] sm:$0xff]
    %v128 = vld [vmem:[#allocation5 + $0xf8] sm:$0xff]
    %129 = vmatprep.subr.mxu0 %v98
    %130 = vmatpush1.msra.mxu0 %v97
    %131 = vmatprep.subr.mxu0 %v100
    %132 = vmatpush1.msra.mxu0 %v99
    %133 = vmatprep.subr.mxu0 %v102
    %134 = vmatpush1.msra.mxu0 %v101
    %135 = vmatprep.subr.mxu0 %v104
    %136 = vmatpush1.msra.mxu0 %v103
    %137 = vmatprep.subr.mxu0 %v106
    %138 = vmatpush1.msra.mxu0 %v105
    %139 = vmatprep.subr.mxu0 %v108
    %140 = vmatpush1.msra.mxu0 %v107
    %141 = vmatprep.subr.mxu0 %v110
    %142 = vmatpush1.msra.mxu0 %v109
    %143 = vmatprep.subr.mxu0 %v112
    %144 = vmatpush1.msra.mxu0 %v111
    %145 = vmatprep.subr.mxu0 %v114
    %146 = vmatpush1.msra.mxu0 %v113
    %147 = vmatprep.subr.mxu0 %v116
    %148 = vmatpush1.msra.mxu0 %v115
    %149 = vmatprep.subr.mxu0 %v118
    %150 = vmatpush1.msra.mxu0 %v117
    %151 = vmatprep.subr.mxu0 %v120
    %152 = vmatpush1.msra.mxu0 %v119
    %153 = vmatprep.subr.mxu0 %v122
    %154 = vmatpush1.msra.mxu0 %v121
    %155 = vmatprep.subr.mxu0 %v124
    %156 = vmatpush1.msra.mxu0 %v123
    %157 = vmatprep.subr.mxu0 %v126
    %158 = vmatpush1.msra.mxu0 %v125
    %159 = vmatprep.subr.mxu0 %v128
    %160 = vmatpush1.msra.mxu0 %v127
    %161 = vmatprep.subr.mxu0 0.0
    %162 = vmatpush1.msra.mxu0 0.0
    %163 = vmatprep.subr.mxu0 0.0
    %164 = vmatpush1.msra.mxu0 0.0
    %165 = vmatprep.subr.mxu0 0.0
    %166 = vmatpush1.msra.mxu0 0.0
    %167 = vmatprep.subr.mxu0 0.0
    %168 = vmatpush1.msra.mxu0 0.0
    %169 = vmatprep.subr.mxu0 0.0
    %170 = vmatpush1.msra.mxu0 0.0
    %171 = vmatprep.subr.mxu0 0.0
    %172 = vmatpush1.msra.mxu0 0.0
    %173 = vmatprep.subr.mxu0 0.0
    %174 = vmatpush1.msra.mxu0 0.0
    %175 = vmatprep.subr.mxu0 0.0
    %176 = vmatpush1.msra.mxu0 0.0
    %177 = vmatprep.subr.mxu0 0.0
    %178 = vmatpush1.msra.mxu0 0.0
    %179 = vmatprep.subr.mxu0 0.0
    %180 = vmatpush1.msra.mxu0 0.0
    %181 = vmatprep.subr.mxu0 0.0
    %182 = vmatpush1.msra.mxu0 0.0
    %183 = vmatprep.subr.mxu0 0.0
    %184 = vmatpush1.msra.mxu0 0.0
    %185 = vmatprep.subr.mxu0 0.0
    %186 = vmatpush1.msra.mxu0 0.0
    %187 = vmatprep.subr.mxu0 0.0
    %188 = vmatpush1.msra.mxu0 0.0
    %189 = vmatprep.subr.mxu0 0.0
    %190 = vmatpush1.msra.mxu0 0.0
    %191 = vmatprep.subr.mxu0 0.0
    %192 = vmatpush1.msra.mxu0 0.0
    %193 = vmatprep.mubr.f32.mxu0 0.0
    %194 = vmatmul.mubr.f32.gmra.mrb[0].mxu0 %v95
    %v195 = vpop.f32.mrb[0].mxu0
    %v196 = vadd.f32 0.0, %v195
    %v197 = vpop.f32.mrb[0].mxu0
    %v198 = vadd.f32 0.0, %v197
    %199 = vmatprep.mubr.f32.mxu0 0.0
    %200 = vmatmul.mubr.f32.gmra.mrb[0].mxu0 %v96
    %v201 = vpop.f32.mrb[0].mxu0
    %v202 = vadd.f32 0.0, %v201
    %v203 = vpop.f32.mrb[0].mxu0
    %v204 = vadd.f32 0.0, %v203
    %205 = vdwg.mxu0
    %v206 = vmul.f32 %v196, %v196
    %v207 = vmul.f32 %v202, %v202
    %v208 = vld [vmem:[#allocation7] sm:$0xff]
    %v209 = vld [vmem:[#allocation7 + $0x8] sm:$0xff]
    %v210 = vld [vmem:[#allocation7 + $0x10] sm:$0xff]
    %v211 = vld [vmem:[#allocation7 + $0x18] sm:$0xff]
    %v212 = vld [vmem:[#allocation7 + $0x20] sm:$0xff]
    %v213 = vld [vmem:[#allocation7 + $0x28] sm:$0xff]
    %v214 = vld [vmem:[#allocation7 + $0x30] sm:$0xff]
    %v215 = vld [vmem:[#allocation7 + $0x38] sm:$0xff]
    %v216 = vld [vmem:[#allocation7 + $0x40] sm:$0xff]
    %v217 = vld [vmem:[#allocation7 + $0x48] sm:$0xff]
    %v218 = vld [vmem:[#allocation7 + $0x50] sm:$0xff]
    %v219 = vld [vmem:[#allocation7 + $0x58] sm:$0xff]
    %v220 = vld [vmem:[#allocation7 + $0x60] sm:$0xff]
    %v221 = vld [vmem:[#allocation7 + $0x68] sm:$0xff]
    %v222 = vld [vmem:[#allocation7 + $0x70] sm:$0xff]
    %v223 = vld [vmem:[#allocation7 + $0x78] sm:$0xff]
    %224 = vmatprep.subr.mxu0 0.0
    %225 = vmatpush1.msra.mxu0 %v208
    %226 = vmatprep.subr.mxu0 0.0
    %227 = vmatpush1.msra.mxu0 %v209
    %228 = vmatprep.subr.mxu0 0.0
    %229 = vmatpush1.msra.mxu0 %v210
    %230 = vmatprep.subr.mxu0 0.0
    %231 = vmatpush1.msra.mxu0 %v211
    %232 = vmatprep.subr.mxu0 0.0
    %233 = vmatpush1.msra.mxu0 %v212
    %234 = vmatprep.subr.mxu0 0.0
    %235 = vmatpush1.msra.mxu0 %v213
    %236 = vmatprep.subr.mxu0 0.0
    %237 = vmatpush1.msra.mxu0 %v214
    %238 = vmatprep.subr.mxu0 0.0
    %239 = vmatpush1.msra.mxu0 %v215
    %240 = vmatprep.subr.mxu0 0.0
    %241 = vmatpush1.msra.mxu0 %v216
    %242 = vmatprep.subr.mxu0 0.0
    %243 = vmatpush1.msra.mxu0 %v217
    %244 = vmatprep.subr.mxu0 0.0
    %245 = vmatpush1.msra.mxu0 %v218
    %246 = vmatprep.subr.mxu0 0.0
    %247 = vmatpush1.msra.mxu0 %v219
    %248 = vmatprep.subr.mxu0 0.0
    %249 = vmatpush1.msra.mxu0 %v220
    %250 = vmatprep.subr.mxu0 0.0
    %251 = vmatpush1.msra.mxu0 %v221
    %252 = vmatprep.subr.mxu0 0.0
    %253 = vmatpush1.msra.mxu0 %v222
    %254 = vmatprep.subr.mxu0 0.0
    %255 = vmatpush1.msra.mxu0 %v223
    %256 = vmatprep.subr.mxu0 0.0
    %257 = vmatpush1.msra.mxu0 0.0
    %258 = vmatprep.subr.mxu0 0.0
    %259 = vmatpush1.msra.mxu0 0.0
    %260 = vmatprep.subr.mxu0 0.0
    %261 = vmatpush1.msra.mxu0 0.0
    %262 = vmatprep.subr.mxu0 0.0
    %263 = vmatpush1.msra.mxu0 0.0
    %264 = vmatprep.subr.mxu0 0.0
    %265 = vmatpush1.msra.mxu0 0.0
    %266 = vmatprep.subr.mxu0 0.0
    %267 = vmatpush1.msra.mxu0 0.0
    %268 = vmatprep.subr.mxu0 0.0
    %269 = vmatpush1.msra.mxu0 0.0
    %270 = vmatprep.subr.mxu0 0.0
    %271 = vmatpush1.msra.mxu0 0.0
    %272 = vmatprep.subr.mxu0 0.0
    %273 = vmatpush1.msra.mxu0 0.0
    %274 = vmatprep.subr.mxu0 0.0
    %275 = vmatpush1.msra.mxu0 0.0
    %276 = vmatprep.subr.mxu0 0.0
    %277 = vmatpush1.msra.mxu0 0.0
    %278 = vmatprep.subr.mxu0 0.0
    %279 = vmatpush1.msra.mxu0 0.0
    %280 = vmatprep.subr.mxu0 0.0
    %281 = vmatpush1.msra.mxu0 0.0
    %282 = vmatprep.subr.mxu0 0.0
    %283 = vmatpush1.msra.mxu0 0.0
    %284 = vmatprep.subr.mxu0 0.0
    %285 = vmatpush1.msra.mxu0 0.0
    %286 = vmatprep.subr.mxu0 0.0
    %287 = vmatpush1.msra.mxu0 0.0
    %288 = vmatprep.mubr.f32.mxu0 0.0
    %289 = vmatmul.mubr.f32.gmra.mrb[0].mxu0 %v206
    %v290 = vpop.f32.mrb[0].mxu0
    %v291 = vadd.f32 0.0, %v290
    %v292 = vpop.f32.mrb[0].mxu0
    %293 = vmatprep.mubr.f32.mxu0 0.0
    %294 = vmatmul.mubr.f32.gmra.mrb[0].mxu0 %v207
    %v295 = vpop.f32.mrb[0].mxu0
    %v296 = vadd.f32 0.0, %v295
    %v297 = vpop.f32.mrb[0].mxu0
    %298 = vdwg.mxu0
    %v299 = vmul.f32 %v198, %v198
    %v300 = vmul.f32 %v204, %v204
    %v301 = vsub.f32 %v291, %v299
    %v302 = vsub.f32 %v296, %v300
    %v303 = vmax.f32 %v301, 0.0
    %v304 = vmax.f32 %v302, 0.0
    %v305 = vsub.f32 %v196, %v198
    %v306 = vsub.f32 %v202, %v204
    %v307 = vadd.f32 %v303, 1e-05
    %v308 = vadd.f32 %v304, 1e-05
    %v309 = vrsqrt.pop %v307
    %v310 = vrsqrt.pop %v308
    %v311 = vmul.f32 %v305, %v309
    %v312 = vmul.f32 %v306, %v310
    %v313 = vld [vmem:[%s3] sm:$0x1]
    %v315 = vlaneseq
    %v316 = vshrl.u32 %v315, 7
    %v317 = vsub.s32 0, %v316
    %v318 = vrot.slane %v313, %v317
    %v320 = vmul.f32 %v311, %v318
    %v321 = vmul.f32 %v312, %v318
    %v322 = vld [vmem:[%s4] sm:$0x1]
    %v324 = vlaneseq
    %v325 = vshrl.u32 %v324, 7
    %v326 = vsub.s32 0, %v325
    %v327 = vrot.slane %v322, %v326
    %v329 = vadd.f32 %v320, %v327
    %v330 = vadd.f32 %v321, %v327
    %v331 = vmax.f32 %v329, 0.0
    %v332 = vmax.f32 %v330, 0.0
    %v333 = vld [vmem:[#allocation8] sm:$0xff]
    %v334 = vld [vmem:[#allocation8 + $0x8] sm:$0xff]
    %v335 = vld [vmem:[#allocation8 + $0x10] sm:$0xff]
    %v336 = vld [vmem:[#allocation8 + $0x18] sm:$0xff]
    %v337 = vld [vmem:[#allocation8 + $0x20] sm:$0xff]
    %v338 = vld [vmem:[#allocation8 + $0x28] sm:$0xff]
    %v339 = vld [vmem:[#allocation8 + $0x30] sm:$0xff]
    %v340 = vld [vmem:[#allocation8 + $0x38] sm:$0xff]
    %v341 = vld [vmem:[#allocation8 + $0x40] sm:$0xff]
    %v342 = vld [vmem:[#allocation8 + $0x48] sm:$0xff]
    %v343 = vld [vmem:[#allocation8 + $0x50] sm:$0xff]
    %v344 = vld [vmem:[#allocation8 + $0x58] sm:$0xff]
    %v345 = vld [vmem:[#allocation8 + $0x60] sm:$0xff]
    %v346 = vld [vmem:[#allocation8 + $0x68] sm:$0xff]
    %v347 = vld [vmem:[#allocation8 + $0x70] sm:$0xff]
    %v348 = vld [vmem:[#allocation8 + $0x78] sm:$0xff]
    %349 = vmatprep.subr.mxu0 0.0
    %350 = vmatpush1.msra.mxu0 %v333
    %351 = vmatprep.subr.mxu0 0.0
    %352 = vmatpush1.msra.mxu0 %v334
    %353 = vmatprep.subr.mxu0 0.0
    %354 = vmatpush1.msra.mxu0 %v335
    %355 = vmatprep.subr.mxu0 0.0
    %356 = vmatpush1.msra.mxu0 %v336
    %357 = vmatprep.subr.mxu0 0.0
    %358 = vmatpush1.msra.mxu0 %v337
    %359 = vmatprep.subr.mxu0 0.0
    %360 = vmatpush1.msra.mxu0 %v338
    %361 = vmatprep.subr.mxu0 0.0
    %362 = vmatpush1.msra.mxu0 %v339
    %363 = vmatprep.subr.mxu0 0.0
    %364 = vmatpush1.msra.mxu0 %v340
    %365 = vmatprep.subr.mxu0 0.0
    %366 = vmatpush1.msra.mxu0 %v341
    %367 = vmatprep.subr.mxu0 0.0
    %368 = vmatpush1.msra.mxu0 %v342
    %369 = vmatprep.subr.mxu0 0.0
    %370 = vmatpush1.msra.mxu0 %v343
    %371 = vmatprep.subr.mxu0 0.0
    %372 = vmatpush1.msra.mxu0 %v344
    %373 = vmatprep.subr.mxu0 0.0
    %374 = vmatpush1.msra.mxu0 %v345
    %375 = vmatprep.subr.mxu0 0.0
    %376 = vmatpush1.msra.mxu0 %v346
    %377 = vmatprep.subr.mxu0 0.0
    %378 = vmatpush1.msra.mxu0 %v347
    %379 = vmatprep.subr.mxu0 0.0
    %380 = vmatpush1.msra.mxu0 %v348
    %381 = vmatprep.subr.mxu0 0.0
    %382 = vmatpush1.msra.mxu0 0.0
    %383 = vmatprep.subr.mxu0 0.0
    %384 = vmatpush1.msra.mxu0 0.0
    %385 = vmatprep.subr.mxu0 0.0
    %386 = vmatpush1.msra.mxu0 0.0
    %387 = vmatprep.subr.mxu0 0.0
    %388 = vmatpush1.msra.mxu0 0.0
    %389 = vmatprep.subr.mxu0 0.0
    %390 = vmatpush1.msra.mxu0 0.0
    %391 = vmatprep.subr.mxu0 0.0
    %392 = vmatpush1.msra.mxu0 0.0
    %393 = vmatprep.subr.mxu0 0.0
    %394 = vmatpush1.msra.mxu0 0.0
    %395 = vmatprep.subr.mxu0 0.0
    %396 = vmatpush1.msra.mxu0 0.0
    %397 = vmatprep.subr.mxu0 0.0
    %398 = vmatpush1.msra.mxu0 0.0
    %399 = vmatprep.subr.mxu0 0.0
    %400 = vmatpush1.msra.mxu0 0.0
    %401 = vmatprep.subr.mxu0 0.0
    %402 = vmatpush1.msra.mxu0 0.0
    %403 = vmatprep.subr.mxu0 0.0
    %404 = vmatpush1.msra.mxu0 0.0
    %405 = vmatprep.subr.mxu0 0.0
    %406 = vmatpush1.msra.mxu0 0.0
    %407 = vmatprep.subr.mxu0 0.0
    %408 = vmatpush1.msra.mxu0 0.0
    %409 = vmatprep.subr.mxu0 0.0
    %410 = vmatpush1.msra.mxu0 0.0
    %411 = vmatprep.subr.mxu0 0.0
    %412 = vmatpush1.msra.mxu0 0.0
    %413 = vmatprep.mubr.f32.mxu0 0.0
    %414 = vmatmul.mubr.f32.gmra.mrb[0].mxu0 %v331
    %v415 = vpop.f32.mrb[0].mxu0
    %v416 = vadd.f32 0.0, %v415
    %v417 = vpop.f32.mrb[0].mxu0
    %418 = vmatprep.mubr.f32.mxu0 0.0
    %419 = vmatmul.mubr.f32.gmra.mrb[0].mxu0 %v332
    %v420 = vpop.f32.mrb[0].mxu0
    %v421 = vadd.f32 0.0, %v420
    %v422 = vpop.f32.mrb[0].mxu0
    %423 = vdwg.mxu0
    %v424 = vmax.f32 %v416, 0.0
    %v425 = vmax.f32 %v421, 0.0
    %v426 = vld [vmem:[#allocation10] sm:$0xff]
    %v427 = vld [vmem:[#allocation10 + $0x8] sm:$0xff]
    %v428 = vld [vmem:[#allocation10 + $0x10] sm:$0xff]
    %v429 = vld [vmem:[#allocation10 + $0x18] sm:$0xff]
    %v430 = vld [vmem:[#allocation10 + $0x20] sm:$0xff]
    %v431 = vld [vmem:[#allocation10 + $0x28] sm:$0xff]
    %v432 = vld [vmem:[#allocation10 + $0x30] sm:$0xff]
    %v433 = vld [vmem:[#allocation10 + $0x38] sm:$0xff]
    %v434 = vld [vmem:[#allocation10 + $0x40] sm:$0xff]
    %v435 = vld [vmem:[#allocation10 + $0x48] sm:$0xff]
    %v436 = vld [vmem:[#allocation10 + $0x50] sm:$0xff]
    %v437 = vld [vmem:[#allocation10 + $0x58] sm:$0xff]
    %v438 = vld [vmem:[#allocation10 + $0x60] sm:$0xff]
    %v439 = vld [vmem:[#allocation10 + $0x68] sm:$0xff]
    %v440 = vld [vmem:[#allocation10 + $0x70] sm:$0xff]
    %v441 = vld [vmem:[#allocation10 + $0x78] sm:$0xff]
    %442 = vmatprep.subr.mxu0 0.0
    %443 = vmatpush1.msra.mxu0 %v426
    %444 = vmatprep.subr.mxu0 0.0
    %445 = vmatpush1.msra.mxu0 %v427
    %446 = vmatprep.subr.mxu0 0.0
    %447 = vmatpush1.msra.mxu0 %v428
    %448 = vmatprep.subr.mxu0 0.0
    %449 = vmatpush1.msra.mxu0 %v429
    %450 = vmatprep.subr.mxu0 0.0
    %451 = vmatpush1.msra.mxu0 %v430
    %452 = vmatprep.subr.mxu0 0.0
    %453 = vmatpush1.msra.mxu0 %v431
    %454 = vmatprep.subr.mxu0 0.0
    %455 = vmatpush1.msra.mxu0 %v432
    %456 = vmatprep.subr.mxu0 0.0
    %457 = vmatpush1.msra.mxu0 %v433
    %458 = vmatprep.subr.mxu0 0.0
    %459 = vmatpush1.msra.mxu0 %v434
    %460 = vmatprep.subr.mxu0 0.0
    %461 = vmatpush1.msra.mxu0 %v435
    %462 = vmatprep.subr.mxu0 0.0
    %463 = vmatpush1.msra.mxu0 %v436
    %464 = vmatprep.subr.mxu0 0.0
    %465 = vmatpush1.msra.mxu0 %v437
    %466 = vmatprep.subr.mxu0 0.0
    %467 = vmatpush1.msra.mxu0 %v438
    %468 = vmatprep.subr.mxu0 0.0
    %469 = vmatpush1.msra.mxu0 %v439
    %470 = vmatprep.subr.mxu0 0.0
    %471 = vmatpush1.msra.mxu0 %v440
    %472 = vmatprep.subr.mxu0 0.0
    %473 = vmatpush1.msra.mxu0 %v441
    %474 = vmatprep.subr.mxu0 0.0
    %475 = vmatpush1.msra.mxu0 0.0
    %476 = vmatprep.subr.mxu0 0.0
    %477 = vmatpush1.msra.mxu0 0.0
    %478 = vmatprep.subr.mxu0 0.0
    %479 = vmatpush1.msra.mxu0 0.0
    %480 = vmatprep.subr.mxu0 0.0
    %481 = vmatpush1.msra.mxu0 0.0
    %482 = vmatprep.subr.mxu0 0.0
    %483 = vmatpush1.msra.mxu0 0.0
    %484 = vmatprep.subr.mxu0 0.0
    %485 = vmatpush1.msra.mxu0 0.0
    %486 = vmatprep.subr.mxu0 0.0
    %487 = vmatpush1.msra.mxu0 0.0
    %488 = vmatprep.subr.mxu0 0.0
    %489 = vmatpush1.msra.mxu0 0.0
    %490 = vmatprep.subr.mxu0 0.0
    %491 = vmatpush1.msra.mxu0 0.0
    %492 = vmatprep.subr.mxu0 0.0
    %493 = vmatpush1.msra.mxu0 0.0
    %494 = vmatprep.subr.mxu0 0.0
    %495 = vmatpush1.msra.mxu0 0.0
    %496 = vmatprep.subr.mxu0 0.0
    %497 = vmatpush1.msra.mxu0 0.0
    %498 = vmatprep.subr.mxu0 0.0
    %499 = vmatpush1.msra.mxu0 0.0
    %500 = vmatprep.subr.mxu0 0.0
    %501 = vmatpush1.msra.mxu0 0.0
    %502 = vmatprep.subr.mxu0 0.0
    %503 = vmatpush1.msra.mxu0 0.0
    %504 = vmatprep.subr.mxu0 0.0
    %505 = vmatpush1.msra.mxu0 0.0
    %506 = vmatprep.mubr.f32.mxu0 0.0
    %507 = vmatmul.mubr.f32.gmra.mrb[0].mxu0 %v424
    %v508 = vpop.f32.mrb[0].mxu0
    %v509 = vadd.f32 0.0, %v508
    %v510 = vpop.f32.mrb[0].mxu0
    %511 = vmatprep.mubr.f32.mxu0 0.0
    %512 = vmatmul.mubr.f32.gmra.mrb[0].mxu0 %v425
    %v513 = vpop.f32.mrb[0].mxu0
    %v514 = vadd.f32 0.0, %v513
    %v515 = vpop.f32.mrb[0].mxu0
    %516 = vdwg.mxu0
    %v517 = vmax.f32 %v509, 0.0
    %v518 = vmax.f32 %v514, 0.0
    %v519 = vadd.f32 %v424, %v517
    %v520 = vadd.f32 %v425, %v518
    %521 = vst [vmem:[#allocation11] sm:$0xff] %v519
    %522 = vst [vmem:[#allocation11 + $0x8] sm:$0xff] %v520
    // Predicated region
    $region50: #{tpu_custom_call.1} parent=1 // pred_check
      _
    $region51: #{tpu_custom_call.1} parent=1 // pred_check_branch
      %524 = sbr.rel (0) target = $region53
    $region52: #{tpu_custom_call.1} parent=1 // pred_region
      %s526 = ssub.s32 256, 256
      %527 = vsyncadd [#allocation4], %s526
      %s528 = sshll.u32 [#allocation11], 4
      %s529 = int_to_ptr.vmem [resolvable:$true] %s528
      %534 = dma.vmem_to_hbm [thread:$0]  %s529, 256, %s7, [#allocation4], 128, 128, 8
    $region53: #{tpu_custom_call.1} parent=1 // pred_fallthru
      _
    // Predicated region
    $region54: #{tpu_custom_call.1} parent=1 // pred_check
      _
    $region55: #{tpu_custom_call.1} parent=1 // pred_check_branch
      %536 = sbr.rel (0) target = $region57
    $region56: #{tpu_custom_call.1} parent=1 // pred_region
      %537 = dma.done [#allocation4], 256
    $region57: #{tpu_custom_call.1} parent=1 // pred_fallthru
      _
    %538 = vsyncpa [#allocation3], 1
    %539 = vsyncpa [#allocation6], 1
    %540 = vsyncpa [#allocation9], 1
    %541 = vsyncpa [#allocation4], 1

</llo_original>
